<compile_context>
chip_gen: v5e
topology: v5e:2x2
jax: 0.10.0
libtpu: 0.0.40
codegen_flags: <defaults>
</compile_context>

<pallas_src>
import functools

import jax
import jax.numpy as jnp
import numpy as np
from jax import lax
from jax.experimental import pallas as pl
from jax.experimental.pallas import tpu as pltpu


def channel_attention_kernel(x_ref, w1t_ref, w2t_ref, o_ref,
                             max_acc, sum_acc,
                             *, hw, t_hw, needs_mask):
    """One (batch-row b, spatial-tile k) grid step.

    x_ref   : (1, C, t_hw)  current spatial tile of batch row b (native dtype)
    w1t_ref : (C, mid)      Conv2d(C, mid, 1).weight.T (squeezed)
    w2t_ref : (mid, C)      Conv2d(mid, C, 1).weight.T (squeezed)
    o_ref   : (1, 1, C)     sigmoid(se(maxpool) + se(avgpool)) for row b
    max_acc : (1, C) f32    running max scratch
    sum_acc : (1, C) f32    running sum scratch
    """
    k = pl.program_id(1)
    n_k = pl.num_programs(1)

    @pl.when(k == 0)
    def _init():
        max_acc[...] = jnp.full_like(max_acc, -jnp.inf)
        sum_acc[...] = jnp.zeros_like(sum_acc)

    def _accumulate(x_max_in, x_sum_in):
        # Per-tile lane reduction; max in input precision (exact), sum in f32.
        tile_max = jnp.max(x_max_in, axis=-1).astype(jnp.float32)   # (1, C)
        tile_sum = jnp.sum(x_sum_in, axis=-1, dtype=jnp.float32)    # (1, C)
        max_acc[...] = jnp.maximum(max_acc[...], tile_max)
        sum_acc[...] = sum_acc[...] + tile_sum

    if not needs_mask:
        # Steady state: HW % t_hw == 0 -> no masking on any grid step.
        _accumulate(x_ref[...], x_ref[...])
    else:
        # Masking cost only on the single final (partial) tile.
        @pl.when(k < n_k - 1)
        def _unmasked():
            _accumulate(x_ref[...], x_ref[...])

        @pl.when(k == n_k - 1)
        def _masked():
            # Upcast this one tile to f32 so -inf / 0 fills are dtype-safe.
            xf = x_ref[...].astype(jnp.float32)          # (1, C, t_hw)
            pos = k * t_hw + lax.broadcasted_iota(jnp.int32, xf.shape, 2)
            valid = pos < hw
            _accumulate(jnp.where(valid, xf, -jnp.inf),
                        jnp.where(valid, xf, 0.0))

    @pl.when(k == n_k - 1)
    def _finalize():
        max_p = max_acc[...]                       # (1, C) f32
        avg_p = sum_acc[...] / jnp.float32(hw)     # true mean (matches jnp.mean)

        # Shared SE MLP runs once on both pooled branches: (2, C) @ (C, mid).
        pooled = jnp.concatenate([max_p, avg_p], axis=0)               # (2, C)
        w1t = w1t_ref[...].astype(jnp.float32)                         # (C, mid)
        w2t = w2t_ref[...].astype(jnp.float32)                         # (mid, C)

        h = jnp.dot(pooled, w1t, preferred_element_type=jnp.float32)   # 1x1 conv #1
        h = jnp.maximum(h, 0.0)                                        # ReLU
        se = jnp.dot(h, w2t, preferred_element_type=jnp.float32)       # 1x1 conv #2

        out = se[0:1, :] + se[1:2, :]              # max branch + avg branch
        o_ref[...] = jax.nn.sigmoid(out)[None, ...].astype(o_ref.dtype)


def _choose_t_hw(hw, c, itemsize, target_bytes=8 * 1024 * 1024):
    """Pick the spatial (lane) tile for a (1, C, t_hw) streamed block.

    Preference order:
      1. Full extent (single tile, always layout-legal, never masked).
      2. Largest multiple of 128 within budget that DIVIDES hw (no masking).
      3. Largest multiple of 128 within budget (only final tile is masked).
    Returns (t_hw, needs_mask).
    """
    per_lane = max(1, c * itemsize)
    budget_lanes = max(128, (target_bytes // per_lane) // 128 * 128)
    if hw <= budget_lanes:
        return hw, False
    best_div = 0
    t = budget_lanes
    while t >= 128:
        if hw % t == 0:
            best_div = t
            break
        t -= 128
    if best_div >= 512:            # divisor tile still big enough to amortize
        return best_div, False     # per-step (~0.35 us) + DMA setup overhead
    return budget_lanes, (hw % budget_lanes) != 0


def channel_attention(x, w1, w2):
    """x: (B, C, H, W) NCHW.  w1: (mid, C), w2: (C, mid). Returns (B, C, 1, 1)."""
    B, C, H, W = x.shape
    mid = w1.shape[0]
    HW = H * W

    x_flat = x.reshape(B, C, HW)       # flatten spatial dims
    w1t = jnp.transpose(w1)            # (C, mid)
    w2t = jnp.transpose(w2)            # (mid, C)

    itemsize = jnp.dtype(x.dtype).itemsize
    vmem_limit = 32 * 1024 * 1024      # safe on v5e/v6e/v7x scoped VMEM
    t_hw, needs_mask = _choose_t_hw(HW, C, itemsize)
    num_tiles = pl.cdiv(HW, t_hw)

    # VMEM floor guard: double-buffered (1, C, t_hw) stream + weights + scratch
    # must fit the scoped limit (t_hw floors at 128 lanes).
    # TODO(synk): for extreme channel counts (>~16K) add a C-blocking grid axis
    # and hoist the SE MLP into the wrapper instead of finalizing in-kernel.
    assert 2 * C * t_hw * itemsize <= vmem_limit - (2 * 1024 * 1024), (
        "streamed tile does not fit scoped VMEM; C-blocking needed")

    kernel = functools.partial(
        channel_attention_kernel, hw=HW, t_hw=t_hw, needs_mask=needs_mask)

    w_bytes = (w1.size + w2.size) * jnp.dtype(w1.dtype).itemsize
    cost = pl.CostEstimate(
        # streamed max+sum reduction dominates; plus the two tiny SE matmuls
        flops=2 * B * C * HW + 2 * (2 * B) * C * mid * 2,
        transcendentals=B * C,                     # sigmoid
        bytes_accessed=B * C * HW * itemsize + w_bytes + B * C * itemsize,
    )

    out = pl.pallas_call(
        kernel,
        out_shape=jax.ShapeDtypeStruct((B, 1, C), x.dtype),
        grid_spec=pltpu.PrefetchScalarGridSpec(
            num_scalar_prefetch=0,
            grid=(B, num_tiles),                   # batch parallel, HW reduction
            in_specs=[
                pl.BlockSpec((1, C, t_hw), lambda b, k: (b, 0, k)),  # streamed x
                pl.BlockSpec((C, mid), lambda b, k: (0, 0)),         # resident w1^T
                pl.BlockSpec((mid, C), lambda b, k: (0, 0)),         # resident w2^T
            ],
            out_specs=pl.BlockSpec((1, 1, C), lambda b, k: (b, 0, 0)),
            scratch_shapes=[
                pltpu.VMEM((1, C), jnp.float32),   # running max
                pltpu.VMEM((1, C), jnp.float32),   # running sum
            ],
        ),
        compiler_params=pltpu.CompilerParams(
            dimension_semantics=("parallel", "arbitrary"),
            vmem_limit_bytes=vmem_limit,
        ),
        cost_estimate=cost,
    )(x_flat, w1t, w2t)

    return out.reshape(B, C, 1, 1)


def channel_attention_ref(x, w1, w2):
    """Pure-JAX reference matching the PyTorch forward."""
    max_p = jnp.max(x, axis=(2, 3))             # AdaptiveMaxPool2d(1)
    avg_p = jnp.mean(x, axis=(2, 3))            # AdaptiveAvgPool2d(1)

    def se(p):
        h = jnp.maximum(p @ w1.T, 0.0)
        return h @ w2.T

    out = jax.nn.sigmoid(se(max_p) + se(avg_p))
    return out[:, :, None, None]


if __name__ == "__main__":
    # Small shapes consistent with the module: channel must be >= reduction.
    B, C, H, W = 2, 64, 16, 16
    reduction = 16
    mid = C // reduction   # 4

    key = jax.random.PRNGKey(0)
    kx, k1, k2 = jax.random.split(key, 3)

    x = jax.random.normal(kx, (B, C, H, W), dtype=jnp.float32)

    # Conv2d 1x1, no bias. PyTorch weights (mid, C, 1, 1) / (C, mid, 1, 1), squeezed.
    w1 = jax.random.normal(k1, (mid, C), dtype=jnp.float32) * np.sqrt(2.0 / C)
    w2 = jax.random.normal(k2, (C, mid), dtype=jnp.float32) * np.sqrt(2.0 / mid)

    out = channel_attention(x, w1, w2)
    out = jax.block_until_ready(out)

    ref = channel_attention_ref(x, w1, w2)
    assert out.shape == (B, C, 1, 1)
    np.testing.assert_allclose(np.asarray(out), np.asarray(ref),
                               rtol=1e-5, atol=1e-5)

    print("KERNEL_OK")
</pallas_src>

<mosaic_0001>
module attributes {stable_mosaic.version = 11 : i64} {
  func.func @channel_attention_kernel(%arg0: i32, %arg1: i32, %arg2: memref<1x64x256xf32, #tpu.memory_space<vmem>>, %arg3: memref<64x4xf32, #tpu.memory_space<vmem>>, %arg4: memref<4x64xf32, #tpu.memory_space<vmem>>, %arg5: memref<1x1x64xf32, #tpu.memory_space<vmem>>, %arg6: memref<1x64xf32, #tpu.memory_space<vmem>>, %arg7: memref<1x64xf32, #tpu.memory_space<vmem>>) attributes {dimension_semantics = [#tpu.dimension_semantics<parallel>, #tpu.dimension_semantics<arbitrary>], iteration_bounds = array<i64: 2, 1>, scalar_prefetch = 0 : i64, scratch_operands = 2 : i64, tpu.core_type = #tpu.core_type<tc>, window_params = [{transform_indices = @transform_0, window_bounds = array<i64: 1, 64, 256>}, {pipeline_mode = #tpu.pipeline_mode<synchronous>, transform_indices = @transform_1, window_bounds = array<i64: 64, 4>}, {pipeline_mode = #tpu.pipeline_mode<synchronous>, transform_indices = @transform_2, window_bounds = array<i64: 4, 64>}, {transform_indices = @transform_3, window_bounds = array<i64: 1, 1, 64>}]} {
    %c0_i32 = arith.constant 0 : i32
    %0 = arith.cmpi eq, %arg1, %c0_i32 : i32
    %1 = arith.extui %0 : i1 to i32
    %c0_i32_0 = arith.constant 0 : i32
    %2 = arith.cmpi ne, %1, %c0_i32_0 : i32
    scf.if %2 {
      %cst_17 = arith.constant 0xFF800000 : f32
      %16 = vector.broadcast %cst_17 : f32 to vector<1x64xf32>
      %c0_18 = arith.constant 0 : index
      %c0_19 = arith.constant 0 : index
      %17 = vector.load %arg6[%c0_18, %c0_19] : memref<1x64xf32, #tpu.memory_space<vmem>>, vector<1x64xf32>
      tpu.vector_store %arg6[%c0_18, %c0_19], %16 {strides = array<i32>} : memref<1x64xf32, #tpu.memory_space<vmem>>, vector<1x64xf32>,
      %cst_20 = arith.constant 0.000000e+00 : f32
      %18 = vector.broadcast %cst_20 : f32 to vector<1x64xf32>
      %c0_21 = arith.constant 0 : index
      %c0_22 = arith.constant 0 : index
      %19 = vector.load %arg7[%c0_21, %c0_22] : memref<1x64xf32, #tpu.memory_space<vmem>>, vector<1x64xf32>
      tpu.vector_store %arg7[%c0_21, %c0_22], %18 {strides = array<i32>} : memref<1x64xf32, #tpu.memory_space<vmem>>, vector<1x64xf32>,
    } else {
    }
    %c0 = arith.constant 0 : index
    %c0_1 = arith.constant 0 : index
    %c0_2 = arith.constant 0 : index
    %3 = vector.load %arg2[%c0, %c0_1, %c0_2] : memref<1x64x256xf32, #tpu.memory_space<vmem>>, vector<1x64x256xf32>
    %c0_3 = arith.constant 0 : index
    %c0_4 = arith.constant 0 : index
    %c0_5 = arith.constant 0 : index
    %4 = vector.load %arg2[%c0_3, %c0_4, %c0_5] : memref<1x64x256xf32, #tpu.memory_space<vmem>>, vector<1x64x256xf32>
    %cst = arith.constant dense<0xFF800000> : vector<1x64xf32>
    %5 = vector.multi_reduction <maximumf>, %3, %cst [2] : vector<1x64x256xf32> to vector<1x64xf32>
    %cst_6 = arith.constant dense<0.000000e+00> : vector<1x64xf32>
    %6 = vector.multi_reduction <add>, %4, %cst_6 [2] : vector<1x64x256xf32> to vector<1x64xf32>
    %c0_7 = arith.constant 0 : index
    %c0_8 = arith.constant 0 : index
    %7 = vector.load %arg6[%c0_7, %c0_8] : memref<1x64xf32, #tpu.memory_space<vmem>>, vector<1x64xf32>
    %8 = arith.maximumf %7, %5 : vector<1x64xf32>
    %c0_9 = arith.constant 0 : index
    %c0_10 = arith.constant 0 : index
    %9 = vector.load %arg6[%c0_9, %c0_10] : memref<1x64xf32, #tpu.memory_space<vmem>>, vector<1x64xf32>
    tpu.vector_store %arg6[%c0_9, %c0_10], %8 {strides = array<i32>} : memref<1x64xf32, #tpu.memory_space<vmem>>, vector<1x64xf32>,
    %c0_11 = arith.constant 0 : index
    %c0_12 = arith.constant 0 : index
    %10 = vector.load %arg7[%c0_11, %c0_12] : memref<1x64xf32, #tpu.memory_space<vmem>>, vector<1x64xf32>
    %11 = arith.addf %10, %6 : vector<1x64xf32>
    %c0_13 = arith.constant 0 : index
    %c0_14 = arith.constant 0 : index
    %12 = vector.load %arg7[%c0_13, %c0_14] : memref<1x64xf32, #tpu.memory_space<vmem>>, vector<1x64xf32>
    tpu.vector_store %arg7[%c0_13, %c0_14], %11 {strides = array<i32>} : memref<1x64xf32, #tpu.memory_space<vmem>>, vector<1x64xf32>,
    %c0_i32_15 = arith.constant 0 : i32
    %13 = arith.cmpi eq, %arg1, %c0_i32_15 : i32
    %14 = arith.extui %13 : i1 to i32
    %c0_i32_16 = arith.constant 0 : i32
    %15 = arith.cmpi ne, %14, %c0_i32_16 : i32
    scf.if %15 {
      %c0_17 = arith.constant 0 : index
      %c0_18 = arith.constant 0 : index
      %16 = vector.load %arg6[%c0_17, %c0_18] : memref<1x64xf32, #tpu.memory_space<vmem>>, vector<1x64xf32>
      %c0_19 = arith.constant 0 : index
      %c0_20 = arith.constant 0 : index
      %17 = vector.load %arg7[%c0_19, %c0_20] : memref<1x64xf32, #tpu.memory_space<vmem>>, vector<1x64xf32>
      %cst_21 = arith.constant 2.560000e+02 : f32
      %18 = vector.broadcast %cst_21 : f32 to vector<1x64xf32>
      %19 = arith.divf %17, %18 : vector<1x64xf32>
      %20 = tpu.concatenate %16, %19 in 0 : vector<1x64xf32>, vector<1x64xf32> -> vector<2x64xf32>
      %c0_22 = arith.constant 0 : index
      %c0_23 = arith.constant 0 : index
      %21 = vector.load %arg3[%c0_22, %c0_23] : memref<64x4xf32, #tpu.memory_space<vmem>>, vector<64x4xf32>
      %c0_24 = arith.constant 0 : index
      %c0_25 = arith.constant 0 : index
      %22 = vector.load %arg4[%c0_24, %c0_25] : memref<4x64xf32, #tpu.memory_space<vmem>>, vector<4x64xf32>
      %cst_26 = arith.constant dense<0.000000e+00> : vector<2x4xf32>
      %23 = tpu.matmul %20, %21, %cst_26 {dimension_numbers = #tpu.dot_dimension_numbers<[1], [0], [0], [1], [0, 0, 1, 1], [], []>} : vector<2x64xf32>, vector<64x4xf32>, vector<2x4xf32> -> vector<2x4xf32>
      %cst_27 = arith.constant 0.000000e+00 : f32
      %24 = vector.broadcast %cst_27 : f32 to vector<2x4xf32>
      %25 = arith.maximumf %23, %24 : vector<2x4xf32>
      %cst_28 = arith.constant dense<0.000000e+00> : vector<2x64xf32>
      %26 = tpu.matmul %25, %22, %cst_28 {dimension_numbers = #tpu.dot_dimension_numbers<[1], [0], [0], [1], [0, 0, 1, 1], [], []>} : vector<2x4xf32>, vector<4x64xf32>, vector<2x64xf32> -> vector<2x64xf32>
      %27 = vector.extract_strided_slice %26 {offsets = [0, 0], sizes = [1, 64], strides = [1, 1]} : vector<2x64xf32> to vector<1x64xf32>
      %28 = vector.extract_strided_slice %26 {offsets = [1, 0], sizes = [1, 64], strides = [1, 1]} : vector<2x64xf32> to vector<1x64xf32>
      %29 = arith.addf %27, %28 : vector<1x64xf32>
      %30 = arith.negf %29 : vector<1x64xf32>
      %31 = math.exp %30 : vector<1x64xf32>
      %cst_29 = arith.constant 1.000000e+00 : f32
      %32 = vector.broadcast %cst_29 : f32 to vector<1x64xf32>
      %33 = arith.addf %32, %31 : vector<1x64xf32>
      %34 = arith.divf %32, %33 : vector<1x64xf32>
      %35 = vector.shape_cast %34 : vector<1x64xf32> to vector<1x1x64xf32>
      %c0_30 = arith.constant 0 : index
      %c0_31 = arith.constant 0 : index
      %c0_32 = arith.constant 0 : index
      %36 = vector.load %arg5[%c0_30, %c0_31, %c0_32] : memref<1x1x64xf32, #tpu.memory_space<vmem>>, vector<1x1x64xf32>
      tpu.vector_store %arg5[%c0_30, %c0_31, %c0_32], %35 {strides = array<i32>} : memref<1x1x64xf32, #tpu.memory_space<vmem>>, vector<1x1x64xf32>,
    } else {
    }
    return
  }
  func.func @transform_0(%arg0: i32, %arg1: i32) -> (i32, i32, i32) {
    %c0_i32 = arith.constant 0 : i32
    %c0_i32_0 = arith.constant 0 : i32
    return %arg0, %c0_i32, %arg1 : i32, i32, i32
  }
  func.func @transform_1(%arg0: i32, %arg1: i32) -> (i32, i32) {
    %c0_i32 = arith.constant 0 : i32
    %c0_i32_0 = arith.constant 0 : i32
    %c0_i32_1 = arith.constant 0 : i32
    return %c0_i32, %c0_i32_0 : i32, i32
  }
  func.func @transform_2(%arg0: i32, %arg1: i32) -> (i32, i32) {
    %c0_i32 = arith.constant 0 : i32
    %c0_i32_0 = arith.constant 0 : i32
    %c0_i32_1 = arith.constant 0 : i32
    return %c0_i32, %c0_i32_0 : i32, i32
  }
  func.func @transform_3(%arg0: i32, %arg1: i32) -> (i32, i32, i32) {
    %c0_i32 = arith.constant 0 : i32
    %c0_i32_0 = arith.constant 0 : i32
    %c0_i32_1 = arith.constant 0 : i32
    return %arg0, %c0_i32, %c0_i32_0 : i32, i32, i32
  }
}

</mosaic_0001>

<llo_original>
// kernel: tpu_custom_call.1
$region0: #{tpu_custom_call.1}
  #allocation0 [shape = 'u32[]', space=smem, size = 0x4, offset = 0x4, fixed_abs, tag = 'smem constant byte address 0x4 - core index']
  #allocation1 [shape = 'u32[72,128]{1,0:T(1,128)}', space=vmem, size = 0x9000, scoped, tag = 'internal scratch']
  #allocation2 [shape = 'f32[1,64]{1,0:T(1,128)}', space=vmem, size = 0x200, scoped, tag = 'scratch operand']
  #allocation3 [shape = 'f32[1,64]{1,0:T(1,128)}', space=vmem, size = 0x200, scoped, tag = 'scratch operand']
  %s0 = inlined_call_operand.hbm [shape: f32[2,64,256], index: 0, kind: input, shape index: {}]
  %s1 = inlined_call_operand.vmem [shape: f32[64,4], index: 1, kind: input, shape index: {}]
  %s2 = inlined_call_operand.vmem [shape: f32[4,64], index: 2, kind: input, shape index: {}]
  %s3 = inlined_call_operand.hbm [shape: f32[2,1,64], index: 3, kind: output, shape index: {}]
  %s4 = sld [smem:[#allocation0]]
  $region57: #{tpu_custom_call.1} parent=0
    _
  %s6 = ssub.s32 1, %s4
  %s7 = scalar_select 0, %s6, %s4
  $region1: #{tpu_custom_call.1} parent=0
    #allocation4 [shape = 'u8[131072]{0}', space=vmem, size = 0x20000, scoped, tag = 'input window, operand 0']
    #allocation5 [shape = 's32[2]{0}', space=sflag, size = 0x8, scoped, tag = 'scoped memory for tpu_custom_call.1']
    #allocation6 [shape = 's32[2]{0}', space=sflag, size = 0x8, scoped, tag = 'scoped memory for tpu_custom_call.1']
    #allocation7 [shape = 'u8[1024]{0}', space=vmem, size = 0x400, scoped, tag = 'output window, operand 0']
    %8 = vsyncpa [#allocation5], 0
    %s9 = scalar_lea.sflag [#allocation5], 1
    %10 = vsyncpa %s9, 0
    %11 = vsyncpa [#allocation6], 0
    %s12 = scalar_lea.sflag [#allocation6], 1
    %13 = vsyncpa %s12, 0
    loop: start=0, step=1, limit=4
    $region2: #{tpu_custom_call.1} parent=1 // loop_pre_header
      _
    $region3: #{tpu_custom_call.1} parent=1 // loop_header
      %s15 = sphi 0, %s19
      %p16 = scmp.ge.s32.totalorder %s15, 4
      %s22 = sphi 0, %s34
      %s23 = sphi 0, %s30
      %s24 = sphi 0, %s22
      %s25 = sphi 0, %s23
      %s26 = sphi 0, %s24
      %s27 = sphi 0, %s25
      %s39 = sphi 0, %s41
      %s42 = sphi 0, %s39
      %s43 = sphi 0, %s42
      %s59 = sphi 0, %s43
      %s63 = sphi 0, %s63
      %s65 = sphi 0, %s63
      %s66 = sphi 0, %s65
      %s80 = sphi 0, %s66
      %s84 = sphi 0, %s84
      %s86 = sphi 0, %s84
      %s87 = sphi 0, %s86
      %s101 = sphi 0, %s87
      %s107 = sphi 0, %s109
      %s110 = sphi 0, %s107
      %s111 = sphi 0, %s110
      %s127 = sphi 0, %s111
    $region4: #{tpu_custom_call.1} parent=1 // loop_header_branch
      %18 = sbr.rel (%p16) target = $region8
    $region5: #{tpu_custom_call.1} parent=1 // loop_body
      %s20 = ssub.s32 %s15, 1
      %s21 = ssub.s32 %s15, 2
      %s28 = sadd.s32 1, %s23
      %p29 = scmp.ge.s32.totalorder %s28, 1
      %s30 = scalar_select %p29, 0, %s28
      %s31 = sadd.s32 1, %s22
      %s32 = scalar_select %p29, %s31, %s22
      %p33 = scmp.ge.s32.totalorder %s32, 2
      %s34 = scalar_select %p33, 0, %s32
      %s35 = ssub.s32 %s22, %s34
      %s36 = ssub.s32 %s23, %s30
      %s37 = sor.u32 %s35, %s36
      %p38 = scmp.eq.s32.totalorder %s37, 0
      %s40 = sadd.s32 %s39, 1
      %s41 = scalar_select %p38, %s39, %s40
      %p44 = pneg %p38
      %p45 = scmp.eq.s32.totalorder %s15, 1
      %p46 = por %p44, %p45
      %p47 = scmp.ne.s32.totalorder %s39, %s42
      %p48 = scmp.eq.s32.totalorder %s15, 0
      %p49 = por %p47, %p48
      %p50 = scmp.ne.s32.totalorder %s39, %s42
      %p51 = scmp.eq.s32.totalorder %s20, 1
      %p52 = por %p50, %p51
      %p53 = scmp.ne.s32.totalorder %s42, %s43
      %p54 = scmp.eq.s32.totalorder %s20, 0
      %p55 = por %p53, %p54
      %p56 = scmp.ne.s32.totalorder %s42, %s43
      %p57 = scmp.eq.s32.totalorder %s21, 1
      %p58 = por %p56, %p57
      %p60 = scmp.ne.s32.totalorder %s43, %s59
      %p61 = scmp.eq.s32.totalorder %s21, 0
      %p62 = por %p60, %p61
      %s64 = sadd.s32 %s63, 1
      %p67 = scmp.eq.s32.totalorder %s15, 1
      %p68 = scmp.ne.s32.totalorder %s63, %s65
      %p69 = scmp.eq.s32.totalorder %s15, 0
      %p70 = por %p68, %p69
      %p71 = scmp.ne.s32.totalorder %s63, %s65
      %p72 = scmp.eq.s32.totalorder %s20, 1
      %p73 = por %p71, %p72
      %p74 = scmp.ne.s32.totalorder %s65, %s66
      %p75 = scmp.eq.s32.totalorder %s20, 0
      %p76 = por %p74, %p75
      %p77 = scmp.ne.s32.totalorder %s65, %s66
      %p78 = scmp.eq.s32.totalorder %s21, 1
      %p79 = por %p77, %p78
      %p81 = scmp.ne.s32.totalorder %s66, %s80
      %p82 = scmp.eq.s32.totalorder %s21, 0
      %p83 = por %p81, %p82
      %s85 = sadd.s32 %s84, 1
      %p88 = scmp.eq.s32.totalorder %s15, 1
      %p89 = scmp.ne.s32.totalorder %s84, %s86
      %p90 = scmp.eq.s32.totalorder %s15, 0
      %p91 = por %p89, %p90
      %p92 = scmp.ne.s32.totalorder %s84, %s86
      %p93 = scmp.eq.s32.totalorder %s20, 1
      %p94 = por %p92, %p93
      %p95 = scmp.ne.s32.totalorder %s86, %s87
      %p96 = scmp.eq.s32.totalorder %s20, 0
      %p97 = por %p95, %p96
      %p98 = scmp.ne.s32.totalorder %s86, %s87
      %p99 = scmp.eq.s32.totalorder %s21, 1
      %p100 = por %p98, %p99
      %p102 = scmp.ne.s32.totalorder %s87, %s101
      %p103 = scmp.eq.s32.totalorder %s21, 0
      %p104 = por %p102, %p103
      %s105 = ssub.s32 %s22, %s34
      %p106 = scmp.eq.s32.totalorder %s105, 0
      %s108 = sadd.s32 %s107, 1
      %s109 = scalar_select %p106, %s107, %s108
      %p112 = pneg %p106
      %p113 = scmp.eq.s32.totalorder %s15, 1
      %p114 = por %p112, %p113
      %p115 = scmp.ne.s32.totalorder %s107, %s110
      %p116 = scmp.eq.s32.totalorder %s15, 0
      %p117 = por %p115, %p116
      %p118 = scmp.ne.s32.totalorder %s107, %s110
      %p119 = scmp.eq.s32.totalorder %s20, 1
      %p120 = por %p118, %p119
      %p121 = scmp.ne.s32.totalorder %s110, %s111
      %p122 = scmp.eq.s32.totalorder %s20, 0
      %p123 = por %p121, %p122
      %p124 = scmp.ne.s32.totalorder %s110, %s111
      %p125 = scmp.eq.s32.totalorder %s21, 1
      %p126 = por %p124, %p125
      %p128 = scmp.ne.s32.totalorder %s111, %s127
      %p129 = scmp.eq.s32.totalorder %s21, 0
      %p130 = por %p128, %p129
      %p131 = scmp.le.s32.totalorder 1, %s15
      %p132 = scmp.lt.s32.totalorder %s15, 3
      %p133 = pnand %p131, %p132
      %p134 = pneg %p133
      // Predicated region
      $region9: #{tpu_custom_call.1} parent=5 // pred_check
        _
      $region10: #{tpu_custom_call.1} parent=5 // pred_check_branch
        %136 = sbr.rel (%p133) target = $region12
      $region11: #{tpu_custom_call.1} parent=5 // pred_region
        %s137 = ssub.s32 %s15, 1
        // Predicated region
        $region13: #{tpu_custom_call.1} parent=11 // pred_check
          %p138 = pneg %p76
        $region14: #{tpu_custom_call.1} parent=11 // pred_check_branch
          %140 = sbr.rel (%p138) target = $region16
        $region15: #{tpu_custom_call.1} parent=11 // pred_region
          _
        $region16: #{tpu_custom_call.1} parent=11 // pred_fallthru
          _
        // Predicated region
        $region17: #{tpu_custom_call.1} parent=11 // pred_check
          %p141 = pneg %p97
        $region18: #{tpu_custom_call.1} parent=11 // pred_check_branch
          %143 = sbr.rel (%p141) target = $region20
        $region19: #{tpu_custom_call.1} parent=11 // pred_region
          _
        $region20: #{tpu_custom_call.1} parent=11 // pred_fallthru
          _
      $region12: #{tpu_custom_call.1} parent=5 // pred_fallthru
        _
      %p144 = scmp.lt.s32.totalorder %s15, 2
      // Predicated region
      $region21: #{tpu_custom_call.1} parent=5 // pred_check
        %p145 = pneg %p144
      $region22: #{tpu_custom_call.1} parent=5 // pred_check_branch
        %147 = sbr.rel (%p145) target = $region24
      $region23: #{tpu_custom_call.1} parent=5 // pred_region
        // Predicated region
        $region25: #{tpu_custom_call.1} parent=23 // pred_check
          %p148 = pneg %p49
        $region26: #{tpu_custom_call.1} parent=23 // pred_check_branch
          %150 = sbr.rel (%p148) target = $region28
        $region27: #{tpu_custom_call.1} parent=23 // pred_region
          %s151 = sand.u32 %s39, 1
          %s152 = scalar_lea.sflag [#allocation5], %s151
          %s153 = sand.u32 %s39, 1
          %s154 = smul.addr %s153, 128
          %s155 = scalar_lea.vmem [#allocation4], %s154
          %s156 = smul.u32 2, %s23
          %158 = vsyncadd %s152, 0
          %s159 = smul.addr %s22, 16
          %s160 = sadd.s32 %s156, %s159
          %s161 = smul.addr %s160, 8
          %s162 = scalar_lea.hbm %s0, %s161
          %s163 = sshll.u32 %s162, 4
          %s164 = int_to_ptr.hbm [resolvable:$true] %s163
          %s165 = sshll.u32 %s155, 4
          %s166 = int_to_ptr.vmem [resolvable:$true] %s165
          %171 = dma.hbm_to_vmem [thread:$0]  %s164, 2048, %s166, %s152, 256, 256, 16
        $region28: #{tpu_custom_call.1} parent=23 // pred_fallthru
          _
      $region24: #{tpu_custom_call.1} parent=5 // pred_fallthru
        _
      %p172 = scmp.le.s32.totalorder 1, %s15
      %p173 = scmp.lt.s32.totalorder %s15, 3
      %p174 = pnand %p172, %p173
      %p175 = pneg %p174
      // Predicated region
      $region29: #{tpu_custom_call.1} parent=5 // pred_check
        _
      $region30: #{tpu_custom_call.1} parent=5 // pred_check_branch
        %177 = sbr.rel (%p174) target = $region32
      $region31: #{tpu_custom_call.1} parent=5 // pred_region
        %s178 = ssub.s32 %s15, 1
        %s179 = sand.u32 %s42, 1
        %s180 = scalar_lea.sflag [#allocation5], %s179
        %s181 = sand.u32 %s42, 1
        %s182 = smul.addr %s181, 128
        %s183 = scalar_lea.vmem [#allocation4], %s182
        // Predicated region
        $region33: #{tpu_custom_call.1} parent=31 // pred_check
          %p184 = pneg %p55
        $region34: #{tpu_custom_call.1} parent=31 // pred_check_branch
          %186 = sbr.rel (%p184) target = $region36
        $region35: #{tpu_custom_call.1} parent=31 // pred_region
          %188 = dma.done %s180, 2048
        $region36: #{tpu_custom_call.1} parent=31 // pred_fallthru
          _
        %s189 = sand.u32 %s42, 1
        %s190 = scalar_lea.sflag [#allocation5], %s189
        %s191 = sand.u32 %s42, 1
        %s192 = smul.addr %s191, 128
        %s193 = scalar_lea.vmem [#allocation4], %s192
        %p194 = pneg %p55
        %p195 = pneg %p52
        %p196 = pneg %p76
        %p197 = pneg %p73
        %p198 = pneg %p97
        %p199 = pneg %p94
        %p200 = pneg %p123
        %p201 = pneg %p120
        %s202 = sand.u32 %s110, 1
        %s203 = scalar_lea.sflag [#allocation6], %s202
        %s204 = sand.u32 %s110, 1
        %s205 = scalar_lea.vmem [#allocation7], %s204
        %s206 = smul.u32 2, %s25
        %p207 = scmp.eq.s32.totalorder %s25, 0
        // Predicated region
        $region37: #{tpu_custom_call.1} parent=31 // pred_check
          %p208 = pneg %p207
        $region38: #{tpu_custom_call.1} parent=31 // pred_check_branch
          %210 = sbr.rel (%p208) target = $region40
        $region39: #{tpu_custom_call.1} parent=31 // pred_region
          %vm211 = vcmask 516096
          %212 = vst.msk [vmem:[#allocation2] sm:$0x1] %vm211, -inf
          %213 = vst.msk [vmem:[#allocation3] sm:$0x1] %vm211, 0.0
        $region40: #{tpu_custom_call.1} parent=31 // pred_fallthru
          _
        %v214 = vld [vmem:[%s183] sm:$0xff]
        %v215 = vld [vmem:[%s183 + $0x8] sm:$0xff]
        %v216 = vld [vmem:[%s183 + $0x10] sm:$0xff]
        %v217 = vld [vmem:[%s183 + $0x18] sm:$0xff]
        %v218 = vld [vmem:[%s183 + $0x20] sm:$0xff]
        %v219 = vld [vmem:[%s183 + $0x28] sm:$0xff]
        %v220 = vld [vmem:[%s183 + $0x30] sm:$0xff]
        %v221 = vld [vmem:[%s183 + $0x38] sm:$0xff]
        %v222 = vld [vmem:[%s183 + $0x40] sm:$0xff]
        %v223 = vld [vmem:[%s183 + $0x48] sm:$0xff]
        %v224 = vld [vmem:[%s183 + $0x50] sm:$0xff]
        %v225 = vld [vmem:[%s183 + $0x58] sm:$0xff]
        %v226 = vld [vmem:[%s183 + $0x60] sm:$0xff]
        %v227 = vld [vmem:[%s183 + $0x68] sm:$0xff]
        %v228 = vld [vmem:[%s183 + $0x70] sm:$0xff]
        %v229 = vld [vmem:[%s183 + $0x78] sm:$0xff]
        %v230 = vmax.f32 %v214, %v215
        %231 = vmax.xlane.f32.xlu0 %v230
        %v232 = vpop.xlane.xlu0 %231
        %v233 = vmax.f32 %v216, %v217
        %234 = vmax.xlane.f32.xlu0 %v233
        %v235 = vpop.xlane.xlu0 %234
        %v236 = vmax.f32 %v218, %v219
        %237 = vmax.xlane.f32.xlu0 %v236
        %v238 = vpop.xlane.xlu0 %237
        %v239 = vmax.f32 %v220, %v221
        %240 = vmax.xlane.f32.xlu0 %v239
        %v241 = vpop.xlane.xlu0 %240
        %v242 = vmax.f32 %v222, %v223
        %243 = vmax.xlane.f32.xlu0 %v242
        %v244 = vpop.xlane.xlu0 %243
        %v245 = vmax.f32 %v224, %v225
        %246 = vmax.xlane.f32.xlu0 %v245
        %v247 = vpop.xlane.xlu0 %246
        %v248 = vmax.f32 %v226, %v227
        %249 = vmax.xlane.f32.xlu0 %v248
        %v250 = vpop.xlane.xlu0 %249
        %v251 = vmax.f32 %v228, %v229
        %252 = vmax.xlane.f32.xlu0 %v251
        %v253 = vpop.xlane.xlu0 %252
        %v254 = vadd.f32 %v214, %v215
        %255 = vadd.xlane.f32.xlu0 %v254
        %v256 = vpop.xlane.xlu0 %255
        %v257 = vadd.f32 %v216, %v217
        %258 = vadd.xlane.f32.xlu0 %v257
        %v259 = vpop.xlane.xlu0 %258
        %v260 = vadd.f32 %v218, %v219
        %261 = vadd.xlane.f32.xlu0 %v260
        %v262 = vpop.xlane.xlu0 %261
        %v263 = vadd.f32 %v220, %v221
        %264 = vadd.xlane.f32.xlu0 %v263
        %v265 = vpop.xlane.xlu0 %264
        %v266 = vadd.f32 %v222, %v223
        %267 = vadd.xlane.f32.xlu0 %v266
        %v268 = vpop.xlane.xlu0 %267
        %v269 = vadd.f32 %v224, %v225
        %270 = vadd.xlane.f32.xlu0 %v269
        %v271 = vpop.xlane.xlu0 %270
        %v272 = vadd.f32 %v226, %v227
        %273 = vadd.xlane.f32.xlu0 %v272
        %v274 = vpop.xlane.xlu0 %273
        %v275 = vadd.f32 %v228, %v229
        %276 = vadd.xlane.f32.xlu0 %v275
        %v277 = vpop.xlane.xlu0 %276
        %v278 = vld [vmem:[#allocation2] sm:$0x1]
        %v287 = vperm.slane %v232, 0
        %v288 = vperm.slane %v232, 1
        %v289 = vperm.slane %v232, 2
        %v290 = vperm.slane %v232, 3
        %v291 = vperm.slane %v232, 4
        %v292 = vperm.slane %v232, 5
        %v293 = vperm.slane %v232, 6
        %v294 = vperm.slane %v232, 7
        %v295 = vperm.slane %v235, 0
        %v296 = vperm.slane %v235, 1
        %v297 = vperm.slane %v235, 2
        %v298 = vperm.slane %v235, 3
        %v299 = vperm.slane %v235, 4
        %v300 = vperm.slane %v235, 5
        %v301 = vperm.slane %v235, 6
        %v302 = vperm.slane %v235, 7
        %v303 = vperm.slane %v238, 0
        %v304 = vperm.slane %v238, 1
        %v305 = vperm.slane %v238, 2
        %v306 = vperm.slane %v238, 3
        %v307 = vperm.slane %v238, 4
        %v308 = vperm.slane %v238, 5
        %v309 = vperm.slane %v238, 6
        %v310 = vperm.slane %v238, 7
        %v311 = vperm.slane %v241, 0
        %v312 = vperm.slane %v241, 1
        %v313 = vperm.slane %v241, 2
        %v314 = vperm.slane %v241, 3
        %v315 = vperm.slane %v241, 4
        %v316 = vperm.slane %v241, 5
        %v317 = vperm.slane %v241, 6
        %v318 = vperm.slane %v241, 7
        %v319 = vperm.slane %v244, 0
        %v320 = vperm.slane %v244, 1
        %v321 = vperm.slane %v244, 2
        %v322 = vperm.slane %v244, 3
        %v323 = vperm.slane %v244, 4
        %v324 = vperm.slane %v244, 5
        %v325 = vperm.slane %v244, 6
        %v326 = vperm.slane %v244, 7
        %v327 = vperm.slane %v247, 0
        %v328 = vperm.slane %v247, 1
        %v329 = vperm.slane %v247, 2
        %v330 = vperm.slane %v247, 3
        %v331 = vperm.slane %v247, 4
        %v332 = vperm.slane %v247, 5
        %v333 = vperm.slane %v247, 6
        %v334 = vperm.slane %v247, 7
        %v335 = vperm.slane %v250, 0
        %v336 = vperm.slane %v250, 1
        %v337 = vperm.slane %v250, 2
        %v338 = vperm.slane %v250, 3
        %v339 = vperm.slane %v250, 4
        %v340 = vperm.slane %v250, 5
        %v341 = vperm.slane %v250, 6
        %v342 = vperm.slane %v250, 7
        %v343 = vperm.slane %v253, 0
        %v344 = vperm.slane %v253, 1
        %v345 = vperm.slane %v253, 2
        %v346 = vperm.slane %v253, 3
        %v347 = vperm.slane %v253, 4
        %v348 = vperm.slane %v253, 5
        %v349 = vperm.slane %v253, 6
        %v350 = vperm.slane %v253, 7
        %351 = vst [vmem:[#allocation1] ss:$9 sm:$0xff] %v287
        %s352 = scalar_lea.vmem [#allocation1], 1
        %353 = vst [vmem:[%s352] ss:$9 sm:$0xff] %v288
        %s354 = scalar_lea.vmem [#allocation1], 2
        %355 = vst [vmem:[%s354] ss:$9 sm:$0xff] %v289
        %s356 = scalar_lea.vmem [#allocation1], 3
        %357 = vst [vmem:[%s356] ss:$9 sm:$0xff] %v290
        %s358 = scalar_lea.vmem [#allocation1], 4
        %359 = vst [vmem:[%s358] ss:$9 sm:$0xff] %v291
        %s360 = scalar_lea.vmem [#allocation1], 5
        %361 = vst [vmem:[%s360] ss:$9 sm:$0xff] %v292
        %s362 = scalar_lea.vmem [#allocation1], 6
        %363 = vst [vmem:[%s362] ss:$9 sm:$0xff] %v293
        %s364 = scalar_lea.vmem [#allocation1], 7
        %365 = vst [vmem:[%s364] ss:$9 sm:$0xff] %v294
        %v366 = vld [vmem:[#allocation1] sm:$0xff]
        %367 = vst [vmem:[#allocation1] ss:$9 sm:$0xff] %v295
        %368 = vst [vmem:[%s352] ss:$9 sm:$0xff] %v296
        %369 = vst [vmem:[%s354] ss:$9 sm:$0xff] %v297
        %370 = vst [vmem:[%s356] ss:$9 sm:$0xff] %v298
        %371 = vst [vmem:[%s358] ss:$9 sm:$0xff] %v299
        %372 = vst [vmem:[%s360] ss:$9 sm:$0xff] %v300
        %373 = vst [vmem:[%s362] ss:$9 sm:$0xff] %v301
        %374 = vst [vmem:[%s364] ss:$9 sm:$0xff] %v302
        %v375 = vld [vmem:[#allocation1] sm:$0xff]
        %376 = vst [vmem:[#allocation1] ss:$9 sm:$0xff] %v303
        %377 = vst [vmem:[%s352] ss:$9 sm:$0xff] %v304
        %378 = vst [vmem:[%s354] ss:$9 sm:$0xff] %v305
        %379 = vst [vmem:[%s356] ss:$9 sm:$0xff] %v306
        %380 = vst [vmem:[%s358] ss:$9 sm:$0xff] %v307
        %381 = vst [vmem:[%s360] ss:$9 sm:$0xff] %v308
        %382 = vst [vmem:[%s362] ss:$9 sm:$0xff] %v309
        %383 = vst [vmem:[%s364] ss:$9 sm:$0xff] %v310
        %v384 = vld [vmem:[#allocation1] sm:$0xff]
        %385 = vst [vmem:[#allocation1] ss:$9 sm:$0xff] %v311
        %386 = vst [vmem:[%s352] ss:$9 sm:$0xff] %v312
        %387 = vst [vmem:[%s354] ss:$9 sm:$0xff] %v313
        %388 = vst [vmem:[%s356] ss:$9 sm:$0xff] %v314
        %389 = vst [vmem:[%s358] ss:$9 sm:$0xff] %v315
        %390 = vst [vmem:[%s360] ss:$9 sm:$0xff] %v316
        %391 = vst [vmem:[%s362] ss:$9 sm:$0xff] %v317
        %392 = vst [vmem:[%s364] ss:$9 sm:$0xff] %v318
        %v393 = vld [vmem:[#allocation1] sm:$0xff]
        %394 = vst [vmem:[#allocation1] ss:$9 sm:$0xff] %v319
        %395 = vst [vmem:[%s352] ss:$9 sm:$0xff] %v320
        %396 = vst [vmem:[%s354] ss:$9 sm:$0xff] %v321
        %397 = vst [vmem:[%s356] ss:$9 sm:$0xff] %v322
        %398 = vst [vmem:[%s358] ss:$9 sm:$0xff] %v323
        %399 = vst [vmem:[%s360] ss:$9 sm:$0xff] %v324
        %400 = vst [vmem:[%s362] ss:$9 sm:$0xff] %v325
        %401 = vst [vmem:[%s364] ss:$9 sm:$0xff] %v326
        %v402 = vld [vmem:[#allocation1] sm:$0xff]
        %403 = vst [vmem:[#allocation1] ss:$9 sm:$0xff] %v327
        %404 = vst [vmem:[%s352] ss:$9 sm:$0xff] %v328
        %405 = vst [vmem:[%s354] ss:$9 sm:$0xff] %v329
        %406 = vst [vmem:[%s356] ss:$9 sm:$0xff] %v330
        %407 = vst [vmem:[%s358] ss:$9 sm:$0xff] %v331
        %408 = vst [vmem:[%s360] ss:$9 sm:$0xff] %v332
        %409 = vst [vmem:[%s362] ss:$9 sm:$0xff] %v333
        %410 = vst [vmem:[%s364] ss:$9 sm:$0xff] %v334
        %v411 = vld [vmem:[#allocation1] sm:$0xff]
        %412 = vst [vmem:[#allocation1] ss:$9 sm:$0xff] %v335
        %413 = vst [vmem:[%s352] ss:$9 sm:$0xff] %v336
        %414 = vst [vmem:[%s354] ss:$9 sm:$0xff] %v337
        %415 = vst [vmem:[%s356] ss:$9 sm:$0xff] %v338
        %416 = vst [vmem:[%s358] ss:$9 sm:$0xff] %v339
        %417 = vst [vmem:[%s360] ss:$9 sm:$0xff] %v340
        %418 = vst [vmem:[%s362] ss:$9 sm:$0xff] %v341
        %419 = vst [vmem:[%s364] ss:$9 sm:$0xff] %v342
        %v420 = vld [vmem:[#allocation1] sm:$0xff]
        %421 = vst [vmem:[#allocation1] ss:$9 sm:$0xff] %v343
        %422 = vst [vmem:[%s352] ss:$9 sm:$0xff] %v344
        %423 = vst [vmem:[%s354] ss:$9 sm:$0xff] %v345
        %424 = vst [vmem:[%s356] ss:$9 sm:$0xff] %v346
        %425 = vst [vmem:[%s358] ss:$9 sm:$0xff] %v347
        %426 = vst [vmem:[%s360] ss:$9 sm:$0xff] %v348
        %427 = vst [vmem:[%s362] ss:$9 sm:$0xff] %v349
        %428 = vst [vmem:[%s364] ss:$9 sm:$0xff] %v350
        %v429 = vld [vmem:[#allocation1] sm:$0xff]
        %430 = vset.pattern.permute.xlu0 0
        %431 = vperm.xlu0 %430, %v366
        %v432 = vpop.permute.xlu0 %431
        %433 = vset.pattern.permute.xlu0 0
        %434 = vperm.xlu0 %433, %v375
        %v435 = vpop.permute.xlu0 %434
        %436 = vset.pattern.permute.xlu0 0
        %437 = vperm.xlu0 %436, %v384
        %v438 = vpop.permute.xlu0 %437
        %439 = vset.pattern.permute.xlu0 0
        %440 = vperm.xlu0 %439, %v393
        %v441 = vpop.permute.xlu0 %440
        %442 = vset.pattern.permute.xlu0 0
        %443 = vperm.xlu0 %442, %v402
        %v444 = vpop.permute.xlu0 %443
        %445 = vset.pattern.permute.xlu0 0
        %446 = vperm.xlu0 %445, %v411
        %v447 = vpop.permute.xlu0 %446
        %448 = vset.pattern.permute.xlu0 0
        %449 = vperm.xlu0 %448, %v420
        %v450 = vpop.permute.xlu0 %449
        %451 = vset.pattern.permute.xlu0 0
        %452 = vperm.xlu0 %451, %v429
        %v453 = vpop.permute.xlu0 %452
        %v454 = vlaneseq
        %v455 = vand.u32 %v454, 127
        %v456 = vperm.slane %v432, %v455
        %v457 = vadd.s32 %v455, 4294967288
        %v458 = vperm.slane %v435, %v457
        %vm459 = vcmask 130112
        %v460 = vsel %vm459, %v458, %v456
        %v461 = vadd.s32 %v455, 4294967280
        %v462 = vperm.slane %v438, %v461
        %vm463 = vcmask 195712
        %v464 = vsel %vm463, %v462, %v460
        %v465 = vadd.s32 %v455, 4294967272
        %v466 = vperm.slane %v441, %v465
        %vm467 = vcmask 261312
        %v468 = vsel %vm467, %v466, %v464
        %v469 = vadd.s32 %v455, 4294967264
        %v470 = vperm.slane %v444, %v469
        %vm471 = vcmask 326912
        %v472 = vsel %vm471, %v470, %v468
        %v473 = vadd.s32 %v455, 4294967256
        %v474 = vperm.slane %v447, %v473
        %vm475 = vcmask 392512
        %v476 = vsel %vm475, %v474, %v472
        %v477 = vadd.s32 %v455, 4294967248
        %v478 = vperm.slane %v450, %v477
        %vm479 = vcmask 458112
        %v480 = vsel %vm479, %v478, %v476
        %v481 = vadd.s32 %v455, 4294967240
        %v482 = vperm.slane %v453, %v481
        %vm483 = vcmask 523712
        %v484 = vsel %vm483, %v482, %v480
        %v486 = vmax.f32 %v278, %v484
        %vm487 = vcmask 516096
        %488 = vst.msk [vmem:[#allocation2] sm:$0x1] %vm487, %v486
        %v489 = vld [vmem:[#allocation3] sm:$0x1]
        %v498 = vperm.slane %v256, 0
        %v499 = vperm.slane %v256, 1
        %v500 = vperm.slane %v256, 2
        %v501 = vperm.slane %v256, 3
        %v502 = vperm.slane %v256, 4
        %v503 = vperm.slane %v256, 5
        %v504 = vperm.slane %v256, 6
        %v505 = vperm.slane %v256, 7
        %v506 = vperm.slane %v259, 0
        %v507 = vperm.slane %v259, 1
        %v508 = vperm.slane %v259, 2
        %v509 = vperm.slane %v259, 3
        %v510 = vperm.slane %v259, 4
        %v511 = vperm.slane %v259, 5
        %v512 = vperm.slane %v259, 6
        %v513 = vperm.slane %v259, 7
        %v514 = vperm.slane %v262, 0
        %v515 = vperm.slane %v262, 1
        %v516 = vperm.slane %v262, 2
        %v517 = vperm.slane %v262, 3
        %v518 = vperm.slane %v262, 4
        %v519 = vperm.slane %v262, 5
        %v520 = vperm.slane %v262, 6
        %v521 = vperm.slane %v262, 7
        %v522 = vperm.slane %v265, 0
        %v523 = vperm.slane %v265, 1
        %v524 = vperm.slane %v265, 2
        %v525 = vperm.slane %v265, 3
        %v526 = vperm.slane %v265, 4
        %v527 = vperm.slane %v265, 5
        %v528 = vperm.slane %v265, 6
        %v529 = vperm.slane %v265, 7
        %v530 = vperm.slane %v268, 0
        %v531 = vperm.slane %v268, 1
        %v532 = vperm.slane %v268, 2
        %v533 = vperm.slane %v268, 3
        %v534 = vperm.slane %v268, 4
        %v535 = vperm.slane %v268, 5
        %v536 = vperm.slane %v268, 6
        %v537 = vperm.slane %v268, 7
        %v538 = vperm.slane %v271, 0
        %v539 = vperm.slane %v271, 1
        %v540 = vperm.slane %v271, 2
        %v541 = vperm.slane %v271, 3
        %v542 = vperm.slane %v271, 4
        %v543 = vperm.slane %v271, 5
        %v544 = vperm.slane %v271, 6
        %v545 = vperm.slane %v271, 7
        %v546 = vperm.slane %v274, 0
        %v547 = vperm.slane %v274, 1
        %v548 = vperm.slane %v274, 2
        %v549 = vperm.slane %v274, 3
        %v550 = vperm.slane %v274, 4
        %v551 = vperm.slane %v274, 5
        %v552 = vperm.slane %v274, 6
        %v553 = vperm.slane %v274, 7
        %v554 = vperm.slane %v277, 0
        %v555 = vperm.slane %v277, 1
        %v556 = vperm.slane %v277, 2
        %v557 = vperm.slane %v277, 3
        %v558 = vperm.slane %v277, 4
        %v559 = vperm.slane %v277, 5
        %v560 = vperm.slane %v277, 6
        %v561 = vperm.slane %v277, 7
        %562 = vst [vmem:[#allocation1] ss:$9 sm:$0xff] %v498
        %s563 = scalar_lea.vmem [#allocation1], 1
        %564 = vst [vmem:[%s563] ss:$9 sm:$0xff] %v499
        %s565 = scalar_lea.vmem [#allocation1], 2
        %566 = vst [vmem:[%s565] ss:$9 sm:$0xff] %v500
        %s567 = scalar_lea.vmem [#allocation1], 3
        %568 = vst [vmem:[%s567] ss:$9 sm:$0xff] %v501
        %s569 = scalar_lea.vmem [#allocation1], 4
        %570 = vst [vmem:[%s569] ss:$9 sm:$0xff] %v502
        %s571 = scalar_lea.vmem [#allocation1], 5
        %572 = vst [vmem:[%s571] ss:$9 sm:$0xff] %v503
        %s573 = scalar_lea.vmem [#allocation1], 6
        %574 = vst [vmem:[%s573] ss:$9 sm:$0xff] %v504
        %s575 = scalar_lea.vmem [#allocation1], 7
        %576 = vst [vmem:[%s575] ss:$9 sm:$0xff] %v505
        %v577 = vld [vmem:[#allocation1] sm:$0xff]
        %578 = vst [vmem:[#allocation1] ss:$9 sm:$0xff] %v506
        %579 = vst [vmem:[%s563] ss:$9 sm:$0xff] %v507
        %580 = vst [vmem:[%s565] ss:$9 sm:$0xff] %v508
        %581 = vst [vmem:[%s567] ss:$9 sm:$0xff] %v509
        %582 = vst [vmem:[%s569] ss:$9 sm:$0xff] %v510
        %583 = vst [vmem:[%s571] ss:$9 sm:$0xff] %v511
        %584 = vst [vmem:[%s573] ss:$9 sm:$0xff] %v512
        %585 = vst [vmem:[%s575] ss:$9 sm:$0xff] %v513
        %v586 = vld [vmem:[#allocation1] sm:$0xff]
        %587 = vst [vmem:[#allocation1] ss:$9 sm:$0xff] %v514
        %588 = vst [vmem:[%s563] ss:$9 sm:$0xff] %v515
        %589 = vst [vmem:[%s565] ss:$9 sm:$0xff] %v516
        %590 = vst [vmem:[%s567] ss:$9 sm:$0xff] %v517
        %591 = vst [vmem:[%s569] ss:$9 sm:$0xff] %v518
        %592 = vst [vmem:[%s571] ss:$9 sm:$0xff] %v519
        %593 = vst [vmem:[%s573] ss:$9 sm:$0xff] %v520
        %594 = vst [vmem:[%s575] ss:$9 sm:$0xff] %v521
        %v595 = vld [vmem:[#allocation1] sm:$0xff]
        %596 = vst [vmem:[#allocation1] ss:$9 sm:$0xff] %v522
        %597 = vst [vmem:[%s563] ss:$9 sm:$0xff] %v523
        %598 = vst [vmem:[%s565] ss:$9 sm:$0xff] %v524
        %599 = vst [vmem:[%s567] ss:$9 sm:$0xff] %v525
        %600 = vst [vmem:[%s569] ss:$9 sm:$0xff] %v526
        %601 = vst [vmem:[%s571] ss:$9 sm:$0xff] %v527
        %602 = vst [vmem:[%s573] ss:$9 sm:$0xff] %v528
        %603 = vst [vmem:[%s575] ss:$9 sm:$0xff] %v529
        %v604 = vld [vmem:[#allocation1] sm:$0xff]
        %605 = vst [vmem:[#allocation1] ss:$9 sm:$0xff] %v530
        %606 = vst [vmem:[%s563] ss:$9 sm:$0xff] %v531
        %607 = vst [vmem:[%s565] ss:$9 sm:$0xff] %v532
        %608 = vst [vmem:[%s567] ss:$9 sm:$0xff] %v533
        %609 = vst [vmem:[%s569] ss:$9 sm:$0xff] %v534
        %610 = vst [vmem:[%s571] ss:$9 sm:$0xff] %v535
        %611 = vst [vmem:[%s573] ss:$9 sm:$0xff] %v536
        %612 = vst [vmem:[%s575] ss:$9 sm:$0xff] %v537
        %v613 = vld [vmem:[#allocation1] sm:$0xff]
        %614 = vst [vmem:[#allocation1] ss:$9 sm:$0xff] %v538
        %615 = vst [vmem:[%s563] ss:$9 sm:$0xff] %v539
        %616 = vst [vmem:[%s565] ss:$9 sm:$0xff] %v540
        %617 = vst [vmem:[%s567] ss:$9 sm:$0xff] %v541
        %618 = vst [vmem:[%s569] ss:$9 sm:$0xff] %v542
        %619 = vst [vmem:[%s571] ss:$9 sm:$0xff] %v543
        %620 = vst [vmem:[%s573] ss:$9 sm:$0xff] %v544
        %621 = vst [vmem:[%s575] ss:$9 sm:$0xff] %v545
        %v622 = vld [vmem:[#allocation1] sm:$0xff]
        %623 = vst [vmem:[#allocation1] ss:$9 sm:$0xff] %v546
        %624 = vst [vmem:[%s563] ss:$9 sm:$0xff] %v547
        %625 = vst [vmem:[%s565] ss:$9 sm:$0xff] %v548
        %626 = vst [vmem:[%s567] ss:$9 sm:$0xff] %v549
        %627 = vst [vmem:[%s569] ss:$9 sm:$0xff] %v550
        %628 = vst [vmem:[%s571] ss:$9 sm:$0xff] %v551
        %629 = vst [vmem:[%s573] ss:$9 sm:$0xff] %v552
        %630 = vst [vmem:[%s575] ss:$9 sm:$0xff] %v553
        %v631 = vld [vmem:[#allocation1] sm:$0xff]
        %632 = vst [vmem:[#allocation1] ss:$9 sm:$0xff] %v554
        %633 = vst [vmem:[%s563] ss:$9 sm:$0xff] %v555
        %634 = vst [vmem:[%s565] ss:$9 sm:$0xff] %v556
        %635 = vst [vmem:[%s567] ss:$9 sm:$0xff] %v557
        %636 = vst [vmem:[%s569] ss:$9 sm:$0xff] %v558
        %637 = vst [vmem:[%s571] ss:$9 sm:$0xff] %v559
        %638 = vst [vmem:[%s573] ss:$9 sm:$0xff] %v560
        %639 = vst [vmem:[%s575] ss:$9 sm:$0xff] %v561
        %v640 = vld [vmem:[#allocation1] sm:$0xff]
        %641 = vset.pattern.permute.xlu0 0
        %642 = vperm.xlu0 %641, %v577
        %v643 = vpop.permute.xlu0 %642
        %644 = vset.pattern.permute.xlu0 0
        %645 = vperm.xlu0 %644, %v586
        %v646 = vpop.permute.xlu0 %645
        %647 = vset.pattern.permute.xlu0 0
        %648 = vperm.xlu0 %647, %v595
        %v649 = vpop.permute.xlu0 %648
        %650 = vset.pattern.permute.xlu0 0
        %651 = vperm.xlu0 %650, %v604
        %v652 = vpop.permute.xlu0 %651
        %653 = vset.pattern.permute.xlu0 0
        %654 = vperm.xlu0 %653, %v613
        %v655 = vpop.permute.xlu0 %654
        %656 = vset.pattern.permute.xlu0 0
        %657 = vperm.xlu0 %656, %v622
        %v658 = vpop.permute.xlu0 %657
        %659 = vset.pattern.permute.xlu0 0
        %660 = vperm.xlu0 %659, %v631
        %v661 = vpop.permute.xlu0 %660
        %662 = vset.pattern.permute.xlu0 0
        %663 = vperm.xlu0 %662, %v640
        %v664 = vpop.permute.xlu0 %663
        %v665 = vperm.slane %v643, %v455
        %v666 = vperm.slane %v646, %v457
        %v667 = vsel %vm459, %v666, %v665
        %v668 = vperm.slane %v649, %v461
        %v669 = vsel %vm463, %v668, %v667
        %v670 = vperm.slane %v652, %v465
        %v671 = vsel %vm467, %v670, %v669
        %v672 = vperm.slane %v655, %v469
        %v673 = vsel %vm471, %v672, %v671
        %v674 = vperm.slane %v658, %v473
        %v675 = vsel %vm475, %v674, %v673
        %v676 = vperm.slane %v661, %v477
        %v677 = vsel %vm479, %v676, %v675
        %v678 = vperm.slane %v664, %v481
        %v679 = vsel %vm483, %v678, %v677
        %v681 = vadd.f32 %v489, %v679
        %682 = vst.msk [vmem:[#allocation3] sm:$0x1] %vm487, %v681
        // Predicated region
        $region41: #{tpu_custom_call.1} parent=31 // pred_check
          %p683 = pneg %p207
        $region42: #{tpu_custom_call.1} parent=31 // pred_check_branch
          %685 = sbr.rel (%p683) target = $region44
        $region43: #{tpu_custom_call.1} parent=31 // pred_region
          %v686 = vld [vmem:[#allocation2] sm:$0x1]
          %v687 = vld [vmem:[#allocation3] sm:$0x1]
          %v688 = vrcp.pop 256.0
          %v689 = vmul.f32 256.0, %v688
          %v690 = vsub.f32 1.0, %v689
          %v691 = vmul.f32 %v688, %v690
          %v692 = vadd.f32 %v688, %v691
          %vm693 = vweird.f32 %v688
          %v694 = vsel %vm693, %v688, %v692
          %v695 = vmul.f32 %v687, %v694
          %v697 = vperm.slane %v695, 0
          %vm699 = vcmask 1040384
          %v700 = vsel %vm699, %v686, %v697
          %v701 = vld [vmem:[%s1] sm:$0xff]
          %v702 = vld [vmem:[%s1 + $0x8] sm:$0xff]
          %v703 = vld [vmem:[%s1 + $0x10] sm:$0xff]
          %v704 = vld [vmem:[%s1 + $0x18] sm:$0xff]
          %v705 = vld [vmem:[%s1 + $0x20] sm:$0xff]
          %v706 = vld [vmem:[%s1 + $0x28] sm:$0xff]
          %v707 = vld [vmem:[%s1 + $0x30] sm:$0xff]
          %v708 = vld [vmem:[%s1 + $0x38] sm:$0xff]
          %v709 = vld [vmem:[%s2] sm:$0xf]
          %vm710 = vcmask 523264
          %v712 = vsel %vm710, %v700, 0
          %714 = vmatpush.msra.mxu0 0.0
          %715 = vmatpush.msra.mxu0 0.0
          %716 = vmatpush.msra.mxu0 0.0
          %717 = vmatpush.msra.mxu0 0.0
          %718 = vmatpush.msra.mxu0 0.0
          %719 = vmatpush.msra.mxu0 0.0
          %720 = vmatpush.msra.mxu0 0.0
          %721 = vmatpush.msra.mxu0 0.0
          %722 = vmatpush.msra.mxu0 %v708
          %723 = vmatpush.msra.mxu0 %v707
          %724 = vmatpush.msra.mxu0 %v706
          %725 = vmatpush.msra.mxu0 %v705
          %726 = vmatpush.msra.mxu0 %v704
          %727 = vmatpush.msra.mxu0 %v703
          %728 = vmatpush.msra.mxu0 %v702
          %729 = vmatpush.msra.mxu0 %v701
          %730 = vmatmul.f32.gmra.mxu0 %v712
          %v731 = vpop.f32.mrf.mxu0
          %v732 = vadd.f32 0.0, %v731
          %733 = vdwg.mxu0
          %v734 = vmax.f32 %v732, 0.0
          %vm735 = vcmask 31744
          %v737 = vsel %vm735, %v734, 0
          %vm739 = vcmask 1043456
          %v741 = vsel %vm739, %v709, 0
          %743 = vmatpush.msra.mxu0 0.0
          %744 = vmatpush.msra.mxu0 0.0
          %745 = vmatpush.msra.mxu0 0.0
          %746 = vmatpush.msra.mxu0 0.0
          %747 = vmatpush.msra.mxu0 0.0
          %748 = vmatpush.msra.mxu0 0.0
          %749 = vmatpush.msra.mxu0 0.0
          %750 = vmatpush.msra.mxu0 0.0
          %751 = vmatpush.msra.mxu0 0.0
          %752 = vmatpush.msra.mxu0 0.0
          %753 = vmatpush.msra.mxu0 0.0
          %754 = vmatpush.msra.mxu0 0.0
          %755 = vmatpush.msra.mxu0 0.0
          %756 = vmatpush.msra.mxu0 0.0
          %757 = vmatpush.msra.mxu0 0.0
          %758 = vmatpush.msra.mxu0 %v741
          %759 = vmatmul.f32.gmra.mxu0 %v737
          %v760 = vpop.f32.mrf.mxu0
          %v761 = vadd.f32 0.0, %v760
          %762 = vdwg.mxu0
          %v764 = vrot.slane %v761, 1
          %v766 = vadd.f32 %v761, %v764
          %v767 = vxor.u32 %v766, 2147483648
          %v768 = vmul.f32 %v767, 1.442695
          %v769 = vpow.pop %v768
          %v770 = vadd.f32 %v769, 1.0
          %v771 = vrcp.pop %v770
          %v772 = vmul.f32 %v770, %v771
          %v773 = vsub.f32 1.0, %v772
          %v774 = vmul.f32 %v771, %v773
          %v775 = vadd.f32 %v771, %v774
          %vm776 = vweird.f32 %v770
          %vm777 = vweird.f32 %v771
          %vm778 = vmor %vm776, %vm777
          %v779 = vsel %vm778, %v771, %v775
          %v780 = vand.u32 2147483647, %v770
          %vm781 = vcmp.eq.f32.partialorder %v780, 8.507059e+37
          %v782 = vand.u32 %v770, 2147483648
          %v783 = vor.u32 1.1754944e-38, %v782
          %v784 = vsel %vm781, %v783, %v779
          %v785 = vmul.f32 1.0, %v784
          %786 = vst.msk [vmem:[%s205] sm:$0x1] %vm487, %v785
        $region44: #{tpu_custom_call.1} parent=31 // pred_fallthru
          _
        %s787 = sand.u32 %s110, 1
        %s788 = scalar_lea.sflag [#allocation6], %s787
        %s789 = sand.u32 %s110, 1
        %s790 = scalar_lea.vmem [#allocation7], %s789
        // Predicated region
        $region45: #{tpu_custom_call.1} parent=31 // pred_check
          %p791 = pneg %p120
        $region46: #{tpu_custom_call.1} parent=31 // pred_check_branch
          %793 = sbr.rel (%p791) target = $region48
        $region47: #{tpu_custom_call.1} parent=31 // pred_region
          %795 = vsyncadd %s788, 0
          %s796 = scalar_lea.hbm %s3, %s24
          %s798 = sshll.u32 %s790, 4
          %s799 = int_to_ptr.vmem [resolvable:$true] %s798
          %s800 = sshll.u32 %s796, 4
          %s801 = int_to_ptr.hbm [resolvable:$true] %s800
          %803 = dma.vmem_to_hbm [thread:$0]  %s799, 16, %s801, %s788
        $region48: #{tpu_custom_call.1} parent=31 // pred_fallthru
          _
      $region32: #{tpu_custom_call.1} parent=5 // pred_fallthru
        _
      %p804 = scmp.le.s32.totalorder 2, %s15
      // Predicated region
      $region49: #{tpu_custom_call.1} parent=5 // pred_check
        %p805 = pneg %p804
      $region50: #{tpu_custom_call.1} parent=5 // pred_check_branch
        %807 = sbr.rel (%p805) target = $region52
      $region51: #{tpu_custom_call.1} parent=5 // pred_region
        %s808 = ssub.s32 %s15, 2
        // Predicated region
        $region53: #{tpu_custom_call.1} parent=51 // pred_check
          %p809 = pneg %p126
        $region54: #{tpu_custom_call.1} parent=51 // pred_check_branch
          %811 = sbr.rel (%p809) target = $region56
        $region55: #{tpu_custom_call.1} parent=51 // pred_region
          %s812 = sand.u32 %s111, 1
          %s813 = scalar_lea.sflag [#allocation6], %s812
          %s814 = sand.u32 %s111, 1
          %s815 = scalar_lea.vmem [#allocation7], %s814
          %817 = dma.done %s813, 16
        $region56: #{tpu_custom_call.1} parent=51 // pred_fallthru
          _
      $region52: #{tpu_custom_call.1} parent=5 // pred_fallthru
        _
    $region6: #{tpu_custom_call.1} parent=1 // loop_footer
      %s19 = sadd.s32 1, %s15
    $region7: #{tpu_custom_call.1} parent=1 // loop_footer_branch
      %14 = sbr.rel target = $region3
    $region8: #{tpu_custom_call.1} parent=1 // loop_exit
      _
    %818 = vsyncpa [#allocation5], 1
    %s819 = scalar_lea.sflag [#allocation5], 1
    %820 = vsyncpa %s819, 1
    %821 = vsyncpa [#allocation6], 1
    %s822 = scalar_lea.sflag [#allocation6], 1
    %823 = vsyncpa %s822, 1

</llo_original>
